<compile_context>
chip_gen: v6e
topology: v6e:2x2x1
jax: 0.10.0
libtpu: 0.0.40
codegen_flags: <defaults>
</compile_context>

<pallas_src>
import functools

import jax
import jax.numpy as jnp
from jax import lax
from jax.experimental import pallas as pl
from jax.experimental.pallas import tpu as pltpu

N_FEATURES = 4
N_WINDOW = 5
N = N_FEATURES * N_WINDOW        # Linear input dim  (20)
F2 = N_FEATURES * N_FEATURES     # Linear output dim (16)


def _round_up(x: int, m: int) -> int:
    return ((x + m - 1) // m) * m


def attention_kernel(gT_ref, w_ref, b_ref, goutT_ref, atsT_ref, *, strip):
    """One grid step = one lane-block of TB batch columns (batch on lanes).

    gT_ref:    (N, TB)   flattened windows, feature-major (row r = g.view(-1)[r])
    w_ref:     (F2, N)   Linear weight (torch layout), VMEM-resident
    b_ref:     (F2, 1)   Linear bias column, VMEM-resident
    goutT_ref: (N, TB)   flattened (g @ ats) per window, feature-major
    atsT_ref:  (F2, TB)  flattened attention matrices, feature-major
    """
    f = N_FEATURES
    tb = gT_ref.shape[1]
    n_strips = tb // strip

    w = w_ref[...]           # (16, 20)  hoisted, resident in vregs
    bias = b_ref[...]        # (16, 1)

    def body(s, carry):
        start = pl.multiple_of(s * strip, strip)
        g = gT_ref[:, pl.ds(start, strip)]                       # (20, S)

        # Linear + ReLU: lane-dense MXU matmul (16,20)@(20,S) + bias.
        z = jnp.dot(w, g, preferred_element_type=jnp.float32) + bias
        ats = jnp.maximum(z, 0.0)                                # (16, S)
        atsT_ref[:, pl.ds(start, strip)] = ats

        # Second product, per window, on the VPU (elementwise over lanes):
        #   gout[w*f + j, :] = sum_k g[w*f + k, :] * ats[k*f + j, :]
        for win in range(N_WINDOW):
            acc = g[win * f:win * f + 1, :] * ats[0:f, :]        # sublane bcast
            for k in range(1, f):
                acc = acc + g[win * f + k:win * f + k + 1, :] * ats[k * f:(k + 1) * f, :]
            goutT_ref[win * f:(win + 1) * f, pl.ds(start, strip)] = acc
        return carry

    lax.fori_loop(0, n_strips, body, 0, unroll=True)


def attention_forward_batched(g_batch, W, b, *, block_lanes=2048, strip=512):
    """g_batch: (B, n_window, n_features) f32; W: (f*f, n) f32; b: (f*f,) f32."""
    B = g_batch.shape[0]
    assert g_batch.shape[1:] == (N_WINDOW, N_FEATURES)

    # Lane-strip and block sizes: multiples of 128 lanes, strip divides block.
    strip = max(128, _round_up(strip, 128))
    block_lanes = max(strip, _round_up(block_lanes, strip))
    tb = min(block_lanes, _round_up(B, strip))     # per-step lane block
    bp = _round_up(B, tb)                          # padded batch (lanes)

    # Feature-major slab: row r holds g.view(-1)[r] across the batch (lanes).
    gT = g_batch.reshape(B, N).T                   # (N, B)
    if bp != B:
        gT = jnp.pad(gT, ((0, 0), (0, bp - B)))
    b2 = b.reshape(F2, 1)

    flops = 2 * bp * (N * F2 + N_WINDOW * N_FEATURES * N_FEATURES)
    bytes_accessed = 4 * (bp * (N + N + F2) + F2 * N + F2)

    kernel = functools.partial(attention_kernel, strip=strip)

    goutT, atsT = pl.pallas_call(
        kernel,
        out_shape=(jax.ShapeDtypeStruct((N, bp), jnp.float32),
                   jax.ShapeDtypeStruct((F2, bp), jnp.float32)),
        grid=(bp // tb,),
        in_specs=[
            pl.BlockSpec((N, tb), lambda i: (0, i)),       # streaming input
            pl.BlockSpec((F2, N), lambda i: (0, 0)),       # weight: resident
            pl.BlockSpec((F2, 1), lambda i: (0, 0)),       # bias:   resident
        ],
        out_specs=(pl.BlockSpec((N, tb), lambda i: (0, i)),
                   pl.BlockSpec((F2, tb), lambda i: (0, i))),
        compiler_params=pltpu.CompilerParams(dimension_semantics=("parallel",)),
        cost_estimate=pl.CostEstimate(flops=flops, transcendentals=0,
                                      bytes_accessed=bytes_accessed),
    )(gT, W, b2)

    gout = goutT[:, :B].T.reshape(B, N_WINDOW, N_FEATURES)
    ats = atsT[:, :B].T.reshape(B, N_FEATURES, N_FEATURES)
    return gout, ats


def attention_forward(g, W, b):
    """Single-window entry point matching the PyTorch module call signature.

    NOTE: prefer attention_forward_batched for many windows — one pallas_call
    per 800-FLOP window is pure launch overhead.
    """
    gout, ats = attention_forward_batched(g[None], W, b,
                                          block_lanes=128, strip=128)
    return gout[0], ats[0]


def attention_reference(g, W, b):
    """Pure-JAX mirror of the PyTorch forward (single window)."""
    f = N_FEATURES
    ats = jax.nn.relu(g.reshape(-1) @ W.T + b).reshape(f, f)
    return g @ ats, ats


if __name__ == "__main__":
    key = jax.random.PRNGKey(0)
    kg, kw, kb = jax.random.split(key, 3)

    # Deterministic synthetic parameters, same shapes as nn.Linear(n, f**2).
    bound = 1.0 / jnp.sqrt(jnp.float32(N))
    W = jax.random.uniform(kw, (F2, N), jnp.float32, -bound, bound)
    b = jax.random.uniform(kb, (F2,), jnp.float32, -bound, bound)

    # Batch of independent windows, each (n_window, n_features).
    B = 300
    g_batch = jax.random.normal(kg, (B, N_WINDOW, N_FEATURES), jnp.float32)

    gout_ref, ats_ref = jax.vmap(attention_reference, in_axes=(0, None, None))(
        g_batch, W, b)

    # 1) Default large-block path (single grid step with lane padding).
    gout, ats = attention_forward_batched(g_batch, W, b)
    gout, ats = jax.block_until_ready(gout), jax.block_until_ready(ats)
    assert jnp.allclose(ats, ats_ref, atol=1e-4, rtol=1e-4)
    assert jnp.allclose(gout, gout_ref, atol=1e-4, rtol=1e-4)

    # 2) Small-block path exercising multiple grid steps (128-lane blocks).
    gout2, ats2 = attention_forward_batched(g_batch, W, b,
                                            block_lanes=128, strip=128)
    gout2, ats2 = jax.block_until_ready(gout2), jax.block_until_ready(ats2)
    assert jnp.allclose(ats2, ats_ref, atol=1e-4, rtol=1e-4)
    assert jnp.allclose(gout2, gout_ref, atol=1e-4, rtol=1e-4)

    # 3) Single-window path (original module call signature).
    g1 = g_batch[0]
    go1, a1 = attention_forward(g1, W, b)
    go1, a1 = jax.block_until_ready(go1), jax.block_until_ready(a1)
    gr1, ar1 = attention_reference(g1, W, b)
    assert jnp.allclose(a1, ar1, atol=1e-4, rtol=1e-4)
    assert jnp.allclose(go1, gr1, atol=1e-4, rtol=1e-4)

    print("KERNEL_OK")
</pallas_src>

<mosaic_0001>
module attributes {stable_mosaic.version = 11 : i64} {
  func.func @attention_kernel(%arg0: i32, %arg1: memref<20x512xf32, #tpu.memory_space<vmem>>, %arg2: memref<16x20xf32, #tpu.memory_space<vmem>>, %arg3: memref<16x1xf32, #tpu.memory_space<vmem>>, %arg4: memref<20x512xf32, #tpu.memory_space<vmem>>, %arg5: memref<16x512xf32, #tpu.memory_space<vmem>>) attributes {dimension_semantics = [#tpu.dimension_semantics<parallel>], iteration_bounds = array<i64: 1>, scalar_prefetch = 0 : i64, scratch_operands = 0 : i64, tpu.core_type = #tpu.core_type<tc>, window_params = [{transform_indices = @transform_0, window_bounds = array<i64: 20, 512>}, {pipeline_mode = #tpu.pipeline_mode<synchronous>, transform_indices = @transform_1, window_bounds = array<i64: 16, 20>}, {pipeline_mode = #tpu.pipeline_mode<synchronous>, transform_indices = @transform_2, window_bounds = array<i64: 16, 1>}, {transform_indices = @transform_3, window_bounds = array<i64: 20, 512>}, {transform_indices = @transform_4, window_bounds = array<i64: 16, 512>}]} {
    %c0 = arith.constant 0 : index
    %c0_0 = arith.constant 0 : index
    %0 = vector.load %arg2[%c0, %c0_0] : memref<16x20xf32, #tpu.memory_space<vmem>>, vector<16x20xf32>
    %c0_1 = arith.constant 0 : index
    %c0_2 = arith.constant 0 : index
    %1 = vector.load %arg3[%c0_1, %c0_2] : memref<16x1xf32, #tpu.memory_space<vmem>>, vector<16x1xf32>
    %c0_i32 = arith.constant 0 : i32
    %c512_i32 = arith.constant 512 : i32
    %2 = arith.muli %c0_i32, %c512_i32 : i32
    %3 = tpu.assume_multiple %2, 512 : i32
    %c0_3 = arith.constant 0 : index
    %4 = arith.index_cast %3 : i32 to index
    %5 = vector.load %arg1[%c0_3, %4] : memref<20x512xf32, #tpu.memory_space<vmem>>, vector<20x512xf32>
    %cst = arith.constant dense<0.000000e+00> : vector<16x512xf32>
    %6 = tpu.matmul %0, %5, %cst {dimension_numbers = #tpu.dot_dimension_numbers<[1], [0], [0], [1], [0, 0, 1, 1], [], []>} : vector<16x20xf32>, vector<20x512xf32>, vector<16x512xf32> -> vector<16x512xf32>
    %7 = vector.broadcast %1 : vector<16x1xf32> to vector<16x512xf32>
    %8 = arith.addf %6, %7 : vector<16x512xf32>
    %cst_4 = arith.constant 0.000000e+00 : f32
    %9 = vector.broadcast %cst_4 : f32 to vector<16x512xf32>
    %10 = arith.maximumf %8, %9 : vector<16x512xf32>
    %c0_5 = arith.constant 0 : index
    %11 = arith.index_cast %3 : i32 to index
    %12 = vector.load %arg5[%c0_5, %11] : memref<16x512xf32, #tpu.memory_space<vmem>>, vector<16x512xf32>
    tpu.vector_store %arg5[%c0_5, %11], %10 {strides = array<i32>} : memref<16x512xf32, #tpu.memory_space<vmem>>, vector<16x512xf32>,
    %13 = vector.extract_strided_slice %5 {offsets = [0, 0], sizes = [1, 512], strides = [1, 1]} : vector<20x512xf32> to vector<1x512xf32>
    %14 = vector.extract_strided_slice %10 {offsets = [0, 0], sizes = [4, 512], strides = [1, 1]} : vector<16x512xf32> to vector<4x512xf32>
    %15 = vector.broadcast %13 : vector<1x512xf32> to vector<4x512xf32>
    %16 = arith.mulf %15, %14 : vector<4x512xf32>
    %17 = vector.extract_strided_slice %5 {offsets = [1, 0], sizes = [1, 512], strides = [1, 1]} : vector<20x512xf32> to vector<1x512xf32>
    %18 = vector.extract_strided_slice %10 {offsets = [4, 0], sizes = [4, 512], strides = [1, 1]} : vector<16x512xf32> to vector<4x512xf32>
    %19 = vector.broadcast %17 : vector<1x512xf32> to vector<4x512xf32>
    %20 = arith.mulf %19, %18 : vector<4x512xf32>
    %21 = arith.addf %16, %20 : vector<4x512xf32>
    %22 = vector.extract_strided_slice %5 {offsets = [2, 0], sizes = [1, 512], strides = [1, 1]} : vector<20x512xf32> to vector<1x512xf32>
    %23 = vector.extract_strided_slice %10 {offsets = [8, 0], sizes = [4, 512], strides = [1, 1]} : vector<16x512xf32> to vector<4x512xf32>
    %24 = vector.broadcast %22 : vector<1x512xf32> to vector<4x512xf32>
    %25 = arith.mulf %24, %23 : vector<4x512xf32>
    %26 = arith.addf %21, %25 : vector<4x512xf32>
    %27 = vector.extract_strided_slice %5 {offsets = [3, 0], sizes = [1, 512], strides = [1, 1]} : vector<20x512xf32> to vector<1x512xf32>
    %28 = vector.extract_strided_slice %10 {offsets = [12, 0], sizes = [4, 512], strides = [1, 1]} : vector<16x512xf32> to vector<4x512xf32>
    %29 = vector.broadcast %27 : vector<1x512xf32> to vector<4x512xf32>
    %30 = arith.mulf %29, %28 : vector<4x512xf32>
    %31 = arith.addf %26, %30 : vector<4x512xf32>
    %c0_6 = arith.constant 0 : index
    %32 = arith.index_cast %3 : i32 to index
    %33 = vector.load %arg4[%c0_6, %32] : memref<20x512xf32, #tpu.memory_space<vmem>>, vector<4x512xf32>
    tpu.vector_store %arg4[%c0_6, %32], %31 {strides = array<i32>} : memref<20x512xf32, #tpu.memory_space<vmem>>, vector<4x512xf32>,
    %34 = vector.extract_strided_slice %5 {offsets = [4, 0], sizes = [1, 512], strides = [1, 1]} : vector<20x512xf32> to vector<1x512xf32>
    %35 = vector.extract_strided_slice %10 {offsets = [0, 0], sizes = [4, 512], strides = [1, 1]} : vector<16x512xf32> to vector<4x512xf32>
    %36 = vector.broadcast %34 : vector<1x512xf32> to vector<4x512xf32>
    %37 = arith.mulf %36, %35 : vector<4x512xf32>
    %38 = vector.extract_strided_slice %5 {offsets = [5, 0], sizes = [1, 512], strides = [1, 1]} : vector<20x512xf32> to vector<1x512xf32>
    %39 = vector.extract_strided_slice %10 {offsets = [4, 0], sizes = [4, 512], strides = [1, 1]} : vector<16x512xf32> to vector<4x512xf32>
    %40 = vector.broadcast %38 : vector<1x512xf32> to vector<4x512xf32>
    %41 = arith.mulf %40, %39 : vector<4x512xf32>
    %42 = arith.addf %37, %41 : vector<4x512xf32>
    %43 = vector.extract_strided_slice %5 {offsets = [6, 0], sizes = [1, 512], strides = [1, 1]} : vector<20x512xf32> to vector<1x512xf32>
    %44 = vector.extract_strided_slice %10 {offsets = [8, 0], sizes = [4, 512], strides = [1, 1]} : vector<16x512xf32> to vector<4x512xf32>
    %45 = vector.broadcast %43 : vector<1x512xf32> to vector<4x512xf32>
    %46 = arith.mulf %45, %44 : vector<4x512xf32>
    %47 = arith.addf %42, %46 : vector<4x512xf32>
    %48 = vector.extract_strided_slice %5 {offsets = [7, 0], sizes = [1, 512], strides = [1, 1]} : vector<20x512xf32> to vector<1x512xf32>
    %49 = vector.extract_strided_slice %10 {offsets = [12, 0], sizes = [4, 512], strides = [1, 1]} : vector<16x512xf32> to vector<4x512xf32>
    %50 = vector.broadcast %48 : vector<1x512xf32> to vector<4x512xf32>
    %51 = arith.mulf %50, %49 : vector<4x512xf32>
    %52 = arith.addf %47, %51 : vector<4x512xf32>
    %c4 = arith.constant 4 : index
    %53 = arith.index_cast %3 : i32 to index
    %54 = vector.load %arg4[%c4, %53] : memref<20x512xf32, #tpu.memory_space<vmem>>, vector<4x512xf32>
    tpu.vector_store %arg4[%c4, %53], %52 {strides = array<i32>} : memref<20x512xf32, #tpu.memory_space<vmem>>, vector<4x512xf32>,
    %55 = vector.extract_strided_slice %5 {offsets = [8, 0], sizes = [1, 512], strides = [1, 1]} : vector<20x512xf32> to vector<1x512xf32>
    %56 = vector.extract_strided_slice %10 {offsets = [0, 0], sizes = [4, 512], strides = [1, 1]} : vector<16x512xf32> to vector<4x512xf32>
    %57 = vector.broadcast %55 : vector<1x512xf32> to vector<4x512xf32>
    %58 = arith.mulf %57, %56 : vector<4x512xf32>
    %59 = vector.extract_strided_slice %5 {offsets = [9, 0], sizes = [1, 512], strides = [1, 1]} : vector<20x512xf32> to vector<1x512xf32>
    %60 = vector.extract_strided_slice %10 {offsets = [4, 0], sizes = [4, 512], strides = [1, 1]} : vector<16x512xf32> to vector<4x512xf32>
    %61 = vector.broadcast %59 : vector<1x512xf32> to vector<4x512xf32>
    %62 = arith.mulf %61, %60 : vector<4x512xf32>
    %63 = arith.addf %58, %62 : vector<4x512xf32>
    %64 = vector.extract_strided_slice %5 {offsets = [10, 0], sizes = [1, 512], strides = [1, 1]} : vector<20x512xf32> to vector<1x512xf32>
    %65 = vector.extract_strided_slice %10 {offsets = [8, 0], sizes = [4, 512], strides = [1, 1]} : vector<16x512xf32> to vector<4x512xf32>
    %66 = vector.broadcast %64 : vector<1x512xf32> to vector<4x512xf32>
    %67 = arith.mulf %66, %65 : vector<4x512xf32>
    %68 = arith.addf %63, %67 : vector<4x512xf32>
    %69 = vector.extract_strided_slice %5 {offsets = [11, 0], sizes = [1, 512], strides = [1, 1]} : vector<20x512xf32> to vector<1x512xf32>
    %70 = vector.extract_strided_slice %10 {offsets = [12, 0], sizes = [4, 512], strides = [1, 1]} : vector<16x512xf32> to vector<4x512xf32>
    %71 = vector.broadcast %69 : vector<1x512xf32> to vector<4x512xf32>
    %72 = arith.mulf %71, %70 : vector<4x512xf32>
    %73 = arith.addf %68, %72 : vector<4x512xf32>
    %c8 = arith.constant 8 : index
    %74 = arith.index_cast %3 : i32 to index
    %75 = vector.load %arg4[%c8, %74] : memref<20x512xf32, #tpu.memory_space<vmem>>, vector<4x512xf32>
    tpu.vector_store %arg4[%c8, %74], %73 {strides = array<i32>} : memref<20x512xf32, #tpu.memory_space<vmem>>, vector<4x512xf32>,
    %76 = vector.extract_strided_slice %5 {offsets = [12, 0], sizes = [1, 512], strides = [1, 1]} : vector<20x512xf32> to vector<1x512xf32>
    %77 = vector.extract_strided_slice %10 {offsets = [0, 0], sizes = [4, 512], strides = [1, 1]} : vector<16x512xf32> to vector<4x512xf32>
    %78 = vector.broadcast %76 : vector<1x512xf32> to vector<4x512xf32>
    %79 = arith.mulf %78, %77 : vector<4x512xf32>
    %80 = vector.extract_strided_slice %5 {offsets = [13, 0], sizes = [1, 512], strides = [1, 1]} : vector<20x512xf32> to vector<1x512xf32>
    %81 = vector.extract_strided_slice %10 {offsets = [4, 0], sizes = [4, 512], strides = [1, 1]} : vector<16x512xf32> to vector<4x512xf32>
    %82 = vector.broadcast %80 : vector<1x512xf32> to vector<4x512xf32>
    %83 = arith.mulf %82, %81 : vector<4x512xf32>
    %84 = arith.addf %79, %83 : vector<4x512xf32>
    %85 = vector.extract_strided_slice %5 {offsets = [14, 0], sizes = [1, 512], strides = [1, 1]} : vector<20x512xf32> to vector<1x512xf32>
    %86 = vector.extract_strided_slice %10 {offsets = [8, 0], sizes = [4, 512], strides = [1, 1]} : vector<16x512xf32> to vector<4x512xf32>
    %87 = vector.broadcast %85 : vector<1x512xf32> to vector<4x512xf32>
    %88 = arith.mulf %87, %86 : vector<4x512xf32>
    %89 = arith.addf %84, %88 : vector<4x512xf32>
    %90 = vector.extract_strided_slice %5 {offsets = [15, 0], sizes = [1, 512], strides = [1, 1]} : vector<20x512xf32> to vector<1x512xf32>
    %91 = vector.extract_strided_slice %10 {offsets = [12, 0], sizes = [4, 512], strides = [1, 1]} : vector<16x512xf32> to vector<4x512xf32>
    %92 = vector.broadcast %90 : vector<1x512xf32> to vector<4x512xf32>
    %93 = arith.mulf %92, %91 : vector<4x512xf32>
    %94 = arith.addf %89, %93 : vector<4x512xf32>
    %c12 = arith.constant 12 : index
    %95 = arith.index_cast %3 : i32 to index
    %96 = vector.load %arg4[%c12, %95] : memref<20x512xf32, #tpu.memory_space<vmem>>, vector<4x512xf32>
    tpu.vector_store %arg4[%c12, %95], %94 {strides = array<i32>} : memref<20x512xf32, #tpu.memory_space<vmem>>, vector<4x512xf32>,
    %97 = vector.extract_strided_slice %5 {offsets = [16, 0], sizes = [1, 512], strides = [1, 1]} : vector<20x512xf32> to vector<1x512xf32>
    %98 = vector.extract_strided_slice %10 {offsets = [0, 0], sizes = [4, 512], strides = [1, 1]} : vector<16x512xf32> to vector<4x512xf32>
    %99 = vector.broadcast %97 : vector<1x512xf32> to vector<4x512xf32>
    %100 = arith.mulf %99, %98 : vector<4x512xf32>
    %101 = vector.extract_strided_slice %5 {offsets = [17, 0], sizes = [1, 512], strides = [1, 1]} : vector<20x512xf32> to vector<1x512xf32>
    %102 = vector.extract_strided_slice %10 {offsets = [4, 0], sizes = [4, 512], strides = [1, 1]} : vector<16x512xf32> to vector<4x512xf32>
    %103 = vector.broadcast %101 : vector<1x512xf32> to vector<4x512xf32>
    %104 = arith.mulf %103, %102 : vector<4x512xf32>
    %105 = arith.addf %100, %104 : vector<4x512xf32>
    %106 = vector.extract_strided_slice %5 {offsets = [18, 0], sizes = [1, 512], strides = [1, 1]} : vector<20x512xf32> to vector<1x512xf32>
    %107 = vector.extract_strided_slice %10 {offsets = [8, 0], sizes = [4, 512], strides = [1, 1]} : vector<16x512xf32> to vector<4x512xf32>
    %108 = vector.broadcast %106 : vector<1x512xf32> to vector<4x512xf32>
    %109 = arith.mulf %108, %107 : vector<4x512xf32>
    %110 = arith.addf %105, %109 : vector<4x512xf32>
    %111 = vector.extract_strided_slice %5 {offsets = [19, 0], sizes = [1, 512], strides = [1, 1]} : vector<20x512xf32> to vector<1x512xf32>
    %112 = vector.extract_strided_slice %10 {offsets = [12, 0], sizes = [4, 512], strides = [1, 1]} : vector<16x512xf32> to vector<4x512xf32>
    %113 = vector.broadcast %111 : vector<1x512xf32> to vector<4x512xf32>
    %114 = arith.mulf %113, %112 : vector<4x512xf32>
    %115 = arith.addf %110, %114 : vector<4x512xf32>
    %c16 = arith.constant 16 : index
    %116 = arith.index_cast %3 : i32 to index
    %117 = vector.load %arg4[%c16, %116] : memref<20x512xf32, #tpu.memory_space<vmem>>, vector<4x512xf32>
    tpu.vector_store %arg4[%c16, %116], %115 {strides = array<i32>} : memref<20x512xf32, #tpu.memory_space<vmem>>, vector<4x512xf32>,
    %c1_i32 = arith.constant 1 : i32
    return
  }
  func.func @transform_0(%arg0: i32) -> (i32, i32) {
    %c0_i32 = arith.constant 0 : i32
    %c0_i32_0 = arith.constant 0 : i32
    return %c0_i32, %arg0 : i32, i32
  }
  func.func @transform_1(%arg0: i32) -> (i32, i32) {
    %c0_i32 = arith.constant 0 : i32
    %c0_i32_0 = arith.constant 0 : i32
    %c0_i32_1 = arith.constant 0 : i32
    return %c0_i32, %c0_i32_0 : i32, i32
  }
  func.func @transform_2(%arg0: i32) -> (i32, i32) {
    %c0_i32 = arith.constant 0 : i32
    %c0_i32_0 = arith.constant 0 : i32
    %c0_i32_1 = arith.constant 0 : i32
    return %c0_i32, %c0_i32_0 : i32, i32
  }
  func.func @transform_3(%arg0: i32) -> (i32, i32) {
    %c0_i32 = arith.constant 0 : i32
    %c0_i32_0 = arith.constant 0 : i32
    return %c0_i32, %arg0 : i32, i32
  }
  func.func @transform_4(%arg0: i32) -> (i32, i32) {
    %c0_i32 = arith.constant 0 : i32
    %c0_i32_0 = arith.constant 0 : i32
    return %c0_i32, %arg0 : i32, i32
  }
}

</mosaic_0001>

<llo_original>
// kernel: tpu_custom_call.1
$region0: #{tpu_custom_call.1}
  #allocation0 [shape = 'u32[]', space=smem, size = 0x4, offset = 0x4, fixed_abs, tag = 'smem constant byte address 0x4 - core index']
  #allocation1 [shape = 'u32[144,128]{1,0:T(1,128)}', space=vmem, size = 0x12000, scoped, tag = 'internal scratch']
  %s0 = inlined_call_operand.hbm [shape: f32[20,512], index: 0, kind: input, shape index: {}]
  %s1 = inlined_call_operand.vmem [shape: f32[16,20], index: 1, kind: input, shape index: {}]
  %s2 = inlined_call_operand.vmem [shape: f32[16,1], index: 2, kind: input, shape index: {}]
  %s3 = inlined_call_operand.hbm [shape: f32[20,512], index: 3, kind: output, shape index: {0}]
  %s4 = inlined_call_operand.hbm [shape: f32[16,512], index: 4, kind: output, shape index: {1}]
  %5 = xla_tuple %s3, %s4
  %s6 = sld [smem:[#allocation0]]
  $region34: #{tpu_custom_call.1} parent=0
    _
  %s8 = ssub.s32 1, %s6
  %s9 = scalar_select 0, %s8, %s6
  $region1: #{tpu_custom_call.1} parent=0
    #allocation2 [shape = 'u8[49152]{0}', space=vmem, size = 0xc000, scoped, tag = 'input window, operand 0, single buffered']
    #allocation3 [shape = 's32[1]{0}', space=sflag, size = 0x4, scoped, tag = 'scoped memory for tpu_custom_call.1']
    #allocation4 [shape = 's32[1]{0}', space=sflag, size = 0x4, scoped, tag = 'scoped memory for tpu_custom_call.1']
    #allocation5 [shape = 'u8[49152]{0}', space=vmem, size = 0xc000, scoped, tag = 'output window, operand 0, single buffered']
    #allocation6 [shape = 'u8[32768]{0}', space=vmem, size = 0x8000, scoped, tag = 'output window, operand 1, single buffered']
    #allocation7 [shape = 's32[1]{0}', space=sflag, size = 0x4, scoped, tag = 'scoped memory for tpu_custom_call.1']
    %10 = vsyncpa [#allocation3], 0
    %11 = vsyncpa [#allocation4], 0
    %12 = vsyncpa [#allocation7], 0
    // Predicated region
    $region2: #{tpu_custom_call.1} parent=1 // pred_check
      _
    $region3: #{tpu_custom_call.1} parent=1 // pred_check_branch
      %14 = sbr.rel (0) target = $region5
    $region4: #{tpu_custom_call.1} parent=1 // pred_region
      %s16 = ssub.s32 1536, 1536
      %17 = vsyncadd [#allocation3], %s16
      %s18 = sshll.u32 [#allocation2], 4
      %s19 = int_to_ptr.vmem [resolvable:$true] %s18
      %24 = dma.hbm_to_vmem [thread:$0]  %s0, 1536, %s19, [#allocation3], 512, 512, 32
    $region5: #{tpu_custom_call.1} parent=1 // pred_fallthru
      _
    // Predicated region
    $region6: #{tpu_custom_call.1} parent=1 // pred_check
      _
    $region7: #{tpu_custom_call.1} parent=1 // pred_check_branch
      %26 = sbr.rel (0) target = $region9
    $region8: #{tpu_custom_call.1} parent=1 // pred_region
      _
    $region9: #{tpu_custom_call.1} parent=1 // pred_fallthru
      _
    // Predicated region
    $region10: #{tpu_custom_call.1} parent=1 // pred_check
      _
    $region11: #{tpu_custom_call.1} parent=1 // pred_check_branch
      %28 = sbr.rel (0) target = $region13
    $region12: #{tpu_custom_call.1} parent=1 // pred_region
      _
    $region13: #{tpu_custom_call.1} parent=1 // pred_fallthru
      _
    // Predicated region
    $region14: #{tpu_custom_call.1} parent=1 // pred_check
      _
    $region15: #{tpu_custom_call.1} parent=1 // pred_check_branch
      %30 = sbr.rel (0) target = $region17
    $region16: #{tpu_custom_call.1} parent=1 // pred_region
      %31 = dma.done [#allocation3], 1536
    $region17: #{tpu_custom_call.1} parent=1 // pred_fallthru
      _
    %v32 = vld [vmem:[%s1] sm:$0xff]
    %v33 = vld [vmem:[%s1 + $0x8] sm:$0xff]
    %v34 = vld [vmem:[%s2] sm:$0xff]
    %v35 = vld [vmem:[%s2 + $0x8] sm:$0xff]
    %v36 = vld [vmem:[#allocation2] sm:$0xff]
    %v37 = vld [vmem:[#allocation2 + $0x8] sm:$0xff]
    %v38 = vld [vmem:[#allocation2 + $0x10] sm:$0xff]
    %v39 = vld [vmem:[#allocation2 + $0x18] sm:$0xff]
    %v40 = vld [vmem:[#allocation2 + $0x20] sm:$0xff]
    %v41 = vld [vmem:[#allocation2 + $0x28] sm:$0xff]
    %v42 = vld [vmem:[#allocation2 + $0x30] sm:$0xff]
    %v43 = vld [vmem:[#allocation2 + $0x38] sm:$0xff]
    %v44 = vld [vmem:[#allocation2 + $0x40] sm:$0xf]
    %v45 = vld [vmem:[#allocation2 + $0x48] sm:$0xf]
    %v46 = vld [vmem:[#allocation2 + $0x50] sm:$0xf]
    %v47 = vld [vmem:[#allocation2 + $0x58] sm:$0xf]
    %49 = vset.pattern.permute.xlu0 0
    %50 = vperm.xlu0 %49, %v34
    %v51 = vpop.permute.xlu0 %50
    %54 = vset.pattern.permute.xlu0 0
    %55 = vperm.xlu0 %54, %v35
    %v56 = vpop.permute.xlu0 %55
    %vm58 = vcmask 162816
    %v60 = vsel %vm58, %v32, 0
    %v63 = vsel %vm58, %v33, 0
    %vm65 = vcmask 1043456
    %v67 = vsel %vm65, %v44, 0
    %v70 = vsel %vm65, %v45, 0
    %v73 = vsel %vm65, %v46, 0
    %v76 = vsel %vm65, %v47, 0
    %78 = vmatprep.subr.mxu0 0.0
    %79 = vmatpush1.msra.mxu0 0.0
    %80 = vmatprep.subr.mxu0 0.0
    %81 = vmatpush1.msra.mxu0 0.0
    %82 = vmatprep.subr.mxu0 0.0
    %83 = vmatpush1.msra.mxu0 0.0
    %84 = vmatprep.subr.mxu0 0.0
    %85 = vmatpush1.msra.mxu0 0.0
    %86 = vmatprep.subr.mxu0 0.0
    %87 = vmatpush1.msra.mxu0 0.0
    %88 = vmatprep.subr.mxu0 0.0
    %89 = vmatpush1.msra.mxu0 0.0
    %90 = vmatprep.subr.mxu0 0.0
    %91 = vmatpush1.msra.mxu0 0.0
    %92 = vmatprep.subr.mxu0 0.0
    %93 = vmatpush1.msra.mxu0 0.0
    %94 = vmatprep.subr.mxu0 0.0
    %95 = vmatpush1.msra.mxu0 0.0
    %96 = vmatprep.subr.mxu0 0.0
    %97 = vmatpush1.msra.mxu0 0.0
    %98 = vmatprep.subr.mxu0 0.0
    %99 = vmatpush1.msra.mxu0 0.0
    %100 = vmatprep.subr.mxu0 0.0
    %101 = vmatpush1.msra.mxu0 0.0
    %102 = vmatprep.subr.mxu0 0.0
    %103 = vmatpush1.msra.mxu0 0.0
    %104 = vmatprep.subr.mxu0 %v70
    %105 = vmatpush1.msra.mxu0 %v67
    %106 = vmatprep.subr.mxu0 %v41
    %107 = vmatpush1.msra.mxu0 %v40
    %108 = vmatprep.subr.mxu0 %v37
    %109 = vmatpush1.msra.mxu0 %v36
    %110 = vmatprep.subr.mxu0 0.0
    %111 = vmatpush2.msra.mxu0 0.0
    %112 = vmatprep.subr.mxu0 0.0
    %113 = vmatpush2.msra.mxu0 0.0
    %114 = vmatprep.subr.mxu0 0.0
    %115 = vmatpush2.msra.mxu0 0.0
    %116 = vmatprep.subr.mxu0 0.0
    %117 = vmatpush2.msra.mxu0 0.0
    %118 = vmatprep.subr.mxu0 0.0
    %119 = vmatpush2.msra.mxu0 0.0
    %120 = vmatprep.subr.mxu0 0.0
    %121 = vmatpush2.msra.mxu0 0.0
    %122 = vmatprep.subr.mxu0 0.0
    %123 = vmatpush2.msra.mxu0 0.0
    %124 = vmatprep.subr.mxu0 0.0
    %125 = vmatpush2.msra.mxu0 0.0
    %126 = vmatprep.subr.mxu0 0.0
    %127 = vmatpush2.msra.mxu0 0.0
    %128 = vmatprep.subr.mxu0 0.0
    %129 = vmatpush2.msra.mxu0 0.0
    %130 = vmatprep.subr.mxu0 0.0
    %131 = vmatpush2.msra.mxu0 0.0
    %132 = vmatprep.subr.mxu0 0.0
    %133 = vmatpush2.msra.mxu0 0.0
    %134 = vmatprep.subr.mxu0 0.0
    %135 = vmatpush2.msra.mxu0 0.0
    %136 = vmatprep.subr.mxu0 0.0
    %137 = vmatpush2.msra.mxu0 0.0
    %138 = vmatprep.subr.mxu0 0.0
    %139 = vmatpush2.msra.mxu0 0.0
    %140 = vmatprep.subr.mxu0 0.0
    %141 = vmatpush2.msra.mxu0 0.0
    %142 = vmatprep.mubr.f32.mxu0 0.0
    %143 = vmatmul.mubr.f32.gmra.mxu0 %v60
    %v144 = vpop.f32.mrf.mxu0
    %v145 = vadd.f32 %v51, %v144
    %v146 = vpop.f32.mrf.mxu0
    %v147 = vadd.f32 %v51, %v146
    %148 = vmatprep.mubr.f32.mxu0 0.0
    %149 = vmatmul.mubr.f32.gmra.mxu0 %v63
    %v150 = vpop.f32.mrf.mxu0
    %v151 = vadd.f32 %v56, %v150
    %v152 = vpop.f32.mrf.mxu0
    %v153 = vadd.f32 %v56, %v152
    %154 = vdwg.mxu0
    %155 = vmatprep.subr.mxu0 0.0
    %156 = vmatpush1.msra.mxu0 0.0
    %157 = vmatprep.subr.mxu0 0.0
    %158 = vmatpush1.msra.mxu0 0.0
    %159 = vmatprep.subr.mxu0 0.0
    %160 = vmatpush1.msra.mxu0 0.0
    %161 = vmatprep.subr.mxu0 0.0
    %162 = vmatpush1.msra.mxu0 0.0
    %163 = vmatprep.subr.mxu0 0.0
    %164 = vmatpush1.msra.mxu0 0.0
    %165 = vmatprep.subr.mxu0 0.0
    %166 = vmatpush1.msra.mxu0 0.0
    %167 = vmatprep.subr.mxu0 0.0
    %168 = vmatpush1.msra.mxu0 0.0
    %169 = vmatprep.subr.mxu0 0.0
    %170 = vmatpush1.msra.mxu0 0.0
    %171 = vmatprep.subr.mxu0 0.0
    %172 = vmatpush1.msra.mxu0 0.0
    %173 = vmatprep.subr.mxu0 0.0
    %174 = vmatpush1.msra.mxu0 0.0
    %175 = vmatprep.subr.mxu0 0.0
    %176 = vmatpush1.msra.mxu0 0.0
    %177 = vmatprep.subr.mxu0 0.0
    %178 = vmatpush1.msra.mxu0 0.0
    %179 = vmatprep.subr.mxu0 0.0
    %180 = vmatpush1.msra.mxu0 0.0
    %181 = vmatprep.subr.mxu0 %v76
    %182 = vmatpush1.msra.mxu0 %v73
    %183 = vmatprep.subr.mxu0 %v43
    %184 = vmatpush1.msra.mxu0 %v42
    %185 = vmatprep.subr.mxu0 %v39
    %186 = vmatpush1.msra.mxu0 %v38
    %187 = vmatprep.subr.mxu0 0.0
    %188 = vmatpush2.msra.mxu0 0.0
    %189 = vmatprep.subr.mxu0 0.0
    %190 = vmatpush2.msra.mxu0 0.0
    %191 = vmatprep.subr.mxu0 0.0
    %192 = vmatpush2.msra.mxu0 0.0
    %193 = vmatprep.subr.mxu0 0.0
    %194 = vmatpush2.msra.mxu0 0.0
    %195 = vmatprep.subr.mxu0 0.0
    %196 = vmatpush2.msra.mxu0 0.0
    %197 = vmatprep.subr.mxu0 0.0
    %198 = vmatpush2.msra.mxu0 0.0
    %199 = vmatprep.subr.mxu0 0.0
    %200 = vmatpush2.msra.mxu0 0.0
    %201 = vmatprep.subr.mxu0 0.0
    %202 = vmatpush2.msra.mxu0 0.0
    %203 = vmatprep.subr.mxu0 0.0
    %204 = vmatpush2.msra.mxu0 0.0
    %205 = vmatprep.subr.mxu0 0.0
    %206 = vmatpush2.msra.mxu0 0.0
    %207 = vmatprep.subr.mxu0 0.0
    %208 = vmatpush2.msra.mxu0 0.0
    %209 = vmatprep.subr.mxu0 0.0
    %210 = vmatpush2.msra.mxu0 0.0
    %211 = vmatprep.subr.mxu0 0.0
    %212 = vmatpush2.msra.mxu0 0.0
    %213 = vmatprep.subr.mxu0 0.0
    %214 = vmatpush2.msra.mxu0 0.0
    %215 = vmatprep.subr.mxu0 0.0
    %216 = vmatpush2.msra.mxu0 0.0
    %217 = vmatprep.subr.mxu0 0.0
    %218 = vmatpush2.msra.mxu0 0.0
    %219 = vmatprep.mubr.f32.mxu0 0.0
    %220 = vmatmul.mubr.f32.gmra.mxu0 %v60
    %v221 = vpop.f32.mrf.mxu0
    %v222 = vadd.f32 %v51, %v221
    %v223 = vpop.f32.mrf.mxu0
    %v224 = vadd.f32 %v51, %v223
    %225 = vmatprep.mubr.f32.mxu0 0.0
    %226 = vmatmul.mubr.f32.gmra.mxu0 %v63
    %v227 = vpop.f32.mrf.mxu0
    %v228 = vadd.f32 %v56, %v227
    %v229 = vpop.f32.mrf.mxu0
    %v230 = vadd.f32 %v56, %v229
    %231 = vdwg.mxu0
    %v232 = vmax.f32 %v145, 0.0
    %v233 = vmax.f32 %v147, 0.0
    %v234 = vmax.f32 %v222, 0.0
    %v235 = vmax.f32 %v224, 0.0
    %v236 = vmax.f32 %v151, 0.0
    %v237 = vmax.f32 %v153, 0.0
    %v238 = vmax.f32 %v228, 0.0
    %v239 = vmax.f32 %v230, 0.0
    %240 = vst [vmem:[#allocation6] sm:$0xff] %v232
    %241 = vst [vmem:[#allocation6 + $0x8] sm:$0xff] %v233
    %242 = vst [vmem:[#allocation6 + $0x10] sm:$0xff] %v234
    %243 = vst [vmem:[#allocation6 + $0x18] sm:$0xff] %v235
    %244 = vst [vmem:[#allocation6 + $0x20] sm:$0xff] %v236
    %245 = vst [vmem:[#allocation6 + $0x28] sm:$0xff] %v237
    %246 = vst [vmem:[#allocation6 + $0x30] sm:$0xff] %v238
    %247 = vst [vmem:[#allocation6 + $0x38] sm:$0xff] %v239
    %v248 = vlaneseq
    %v249 = vshrl.u32 %v248, 7
    %v250 = vsub.s32 0, %v249
    %v251 = vrot.slane %v36, %v250
    %v252 = vlaneseq
    %v253 = vshrl.u32 %v252, 7
    %v254 = vsub.s32 0, %v253
    %v255 = vrot.slane %v37, %v254
    %v256 = vlaneseq
    %v257 = vshrl.u32 %v256, 7
    %v258 = vsub.s32 0, %v257
    %v259 = vrot.slane %v38, %v258
    %v260 = vlaneseq
    %v261 = vshrl.u32 %v260, 7
    %v262 = vsub.s32 0, %v261
    %v263 = vrot.slane %v39, %v262
    %v264 = vmul.f32 %v251, %v232
    %v265 = vmul.f32 %v255, %v233
    %v266 = vmul.f32 %v259, %v234
    %v267 = vmul.f32 %v263, %v235
    %v268 = vlaneseq
    %v269 = vshrl.u32 %v268, 7
    %v270 = vsub.s32 1, %v269
    %v271 = vrot.slane %v36, %v270
    %v272 = vlaneseq
    %v273 = vshrl.u32 %v272, 7
    %v274 = vsub.s32 1, %v273
    %v275 = vrot.slane %v37, %v274
    %v276 = vlaneseq
    %v277 = vshrl.u32 %v276, 7
    %v278 = vsub.s32 1, %v277
    %v279 = vrot.slane %v38, %v278
    %v280 = vlaneseq
    %v281 = vshrl.u32 %v280, 7
    %v282 = vsub.s32 1, %v281
    %v283 = vrot.slane %v39, %v282
    %v284 = vmul.f32 %v271, %v232
    %v285 = vmul.f32 %v275, %v233
    %v286 = vmul.f32 %v279, %v234
    %v287 = vmul.f32 %v283, %v235
    %v292 = vrot.slane %v284, 4
    %v293 = vrot.slane %v285, 4
    %v294 = vrot.slane %v286, 4
    %v295 = vrot.slane %v287, 4
    %v300 = vadd.f32 %v264, %v292
    %v301 = vadd.f32 %v265, %v293
    %v302 = vadd.f32 %v266, %v294
    %v303 = vadd.f32 %v267, %v295
    %v304 = vlaneseq
    %v305 = vshrl.u32 %v304, 7
    %v306 = vsub.s32 2, %v305
    %v307 = vrot.slane %v36, %v306
    %v308 = vlaneseq
    %v309 = vshrl.u32 %v308, 7
    %v310 = vsub.s32 2, %v309
    %v311 = vrot.slane %v37, %v310
    %v312 = vlaneseq
    %v313 = vshrl.u32 %v312, 7
    %v314 = vsub.s32 2, %v313
    %v315 = vrot.slane %v38, %v314
    %v316 = vlaneseq
    %v317 = vshrl.u32 %v316, 7
    %v318 = vsub.s32 2, %v317
    %v319 = vrot.slane %v39, %v318
    %v320 = vmul.f32 %v307, %v236
    %v321 = vmul.f32 %v311, %v237
    %v322 = vmul.f32 %v315, %v238
    %v323 = vmul.f32 %v319, %v239
    %v324 = vadd.f32 %v300, %v320
    %v325 = vadd.f32 %v301, %v321
    %v326 = vadd.f32 %v302, %v322
    %v327 = vadd.f32 %v303, %v323
    %v328 = vlaneseq
    %v329 = vshrl.u32 %v328, 7
    %v330 = vsub.s32 3, %v329
    %v331 = vrot.slane %v36, %v330
    %v332 = vlaneseq
    %v333 = vshrl.u32 %v332, 7
    %v334 = vsub.s32 3, %v333
    %v335 = vrot.slane %v37, %v334
    %v336 = vlaneseq
    %v337 = vshrl.u32 %v336, 7
    %v338 = vsub.s32 3, %v337
    %v339 = vrot.slane %v38, %v338
    %v340 = vlaneseq
    %v341 = vshrl.u32 %v340, 7
    %v342 = vsub.s32 3, %v341
    %v343 = vrot.slane %v39, %v342
    %v344 = vmul.f32 %v331, %v236
    %v345 = vmul.f32 %v335, %v237
    %v346 = vmul.f32 %v339, %v238
    %v347 = vmul.f32 %v343, %v239
    %v352 = vrot.slane %v344, 4
    %v353 = vrot.slane %v345, 4
    %v354 = vrot.slane %v346, 4
    %v355 = vrot.slane %v347, 4
    %v360 = vadd.f32 %v324, %v352
    %v361 = vadd.f32 %v325, %v353
    %v362 = vadd.f32 %v326, %v354
    %v363 = vadd.f32 %v327, %v355
    %364 = vst [vmem:[#allocation5] sm:$0xf] %v360
    %365 = vst [vmem:[#allocation5 + $0x8] sm:$0xf] %v361
    %366 = vst [vmem:[#allocation5 + $0x10] sm:$0xf] %v362
    %367 = vst [vmem:[#allocation5 + $0x18] sm:$0xf] %v363
    %v368 = vlaneseq
    %v369 = vshrl.u32 %v368, 7
    %v370 = vsub.s32 4, %v369
    %v371 = vrot.slane %v36, %v370
    %v372 = vlaneseq
    %v373 = vshrl.u32 %v372, 7
    %v374 = vsub.s32 4, %v373
    %v375 = vrot.slane %v37, %v374
    %v376 = vlaneseq
    %v377 = vshrl.u32 %v376, 7
    %v378 = vsub.s32 4, %v377
    %v379 = vrot.slane %v38, %v378
    %v380 = vlaneseq
    %v381 = vshrl.u32 %v380, 7
    %v382 = vsub.s32 4, %v381
    %v383 = vrot.slane %v39, %v382
    %v384 = vmul.f32 %v371, %v232
    %v385 = vmul.f32 %v375, %v233
    %v386 = vmul.f32 %v379, %v234
    %v387 = vmul.f32 %v383, %v235
    %v388 = vlaneseq
    %v389 = vshrl.u32 %v388, 7
    %v390 = vsub.s32 5, %v389
    %v391 = vrot.slane %v36, %v390
    %v392 = vlaneseq
    %v393 = vshrl.u32 %v392, 7
    %v394 = vsub.s32 5, %v393
    %v395 = vrot.slane %v37, %v394
    %v396 = vlaneseq
    %v397 = vshrl.u32 %v396, 7
    %v398 = vsub.s32 5, %v397
    %v399 = vrot.slane %v38, %v398
    %v400 = vlaneseq
    %v401 = vshrl.u32 %v400, 7
    %v402 = vsub.s32 5, %v401
    %v403 = vrot.slane %v39, %v402
    %v404 = vmul.f32 %v391, %v232
    %v405 = vmul.f32 %v395, %v233
    %v406 = vmul.f32 %v399, %v234
    %v407 = vmul.f32 %v403, %v235
    %v412 = vrot.slane %v404, 4
    %v413 = vrot.slane %v405, 4
    %v414 = vrot.slane %v406, 4
    %v415 = vrot.slane %v407, 4
    %v420 = vadd.f32 %v384, %v412
    %v421 = vadd.f32 %v385, %v413
    %v422 = vadd.f32 %v386, %v414
    %v423 = vadd.f32 %v387, %v415
    %v424 = vlaneseq
    %v425 = vshrl.u32 %v424, 7
    %v426 = vsub.s32 6, %v425
    %v427 = vrot.slane %v36, %v426
    %v428 = vlaneseq
    %v429 = vshrl.u32 %v428, 7
    %v430 = vsub.s32 6, %v429
    %v431 = vrot.slane %v37, %v430
    %v432 = vlaneseq
    %v433 = vshrl.u32 %v432, 7
    %v434 = vsub.s32 6, %v433
    %v435 = vrot.slane %v38, %v434
    %v436 = vlaneseq
    %v437 = vshrl.u32 %v436, 7
    %v438 = vsub.s32 6, %v437
    %v439 = vrot.slane %v39, %v438
    %v440 = vmul.f32 %v427, %v236
    %v441 = vmul.f32 %v431, %v237
    %v442 = vmul.f32 %v435, %v238
    %v443 = vmul.f32 %v439, %v239
    %v444 = vadd.f32 %v420, %v440
    %v445 = vadd.f32 %v421, %v441
    %v446 = vadd.f32 %v422, %v442
    %v447 = vadd.f32 %v423, %v443
    %v448 = vlaneseq
    %v449 = vshrl.u32 %v448, 7
    %v450 = vsub.s32 7, %v449
    %v451 = vrot.slane %v36, %v450
    %v452 = vlaneseq
    %v453 = vshrl.u32 %v452, 7
    %v454 = vsub.s32 7, %v453
    %v455 = vrot.slane %v37, %v454
    %v456 = vlaneseq
    %v457 = vshrl.u32 %v456, 7
    %v458 = vsub.s32 7, %v457
    %v459 = vrot.slane %v38, %v458
    %v460 = vlaneseq
    %v461 = vshrl.u32 %v460, 7
    %v462 = vsub.s32 7, %v461
    %v463 = vrot.slane %v39, %v462
    %v464 = vmul.f32 %v451, %v236
    %v465 = vmul.f32 %v455, %v237
    %v466 = vmul.f32 %v459, %v238
    %v467 = vmul.f32 %v463, %v239
    %v472 = vrot.slane %v464, 4
    %v473 = vrot.slane %v465, 4
    %v474 = vrot.slane %v466, 4
    %v475 = vrot.slane %v467, 4
    %v480 = vadd.f32 %v444, %v472
    %v481 = vadd.f32 %v445, %v473
    %v482 = vadd.f32 %v446, %v474
    %v483 = vadd.f32 %v447, %v475
    %v488 = vrot.slane %v480, 4
    %v489 = vrot.slane %v481, 4
    %v490 = vrot.slane %v482, 4
    %v491 = vrot.slane %v483, 4
    %496 = vst [vmem:[#allocation5] sm:$0xf0] %v488
    %497 = vst [vmem:[#allocation5 + $0x8] sm:$0xf0] %v489
    %498 = vst [vmem:[#allocation5 + $0x10] sm:$0xf0] %v490
    %499 = vst [vmem:[#allocation5 + $0x18] sm:$0xf0] %v491
    %v500 = vlaneseq
    %v501 = vshrl.u32 %v500, 7
    %v502 = vsub.s32 0, %v501
    %v503 = vrot.slane %v40, %v502
    %v504 = vlaneseq
    %v505 = vshrl.u32 %v504, 7
    %v506 = vsub.s32 0, %v505
    %v507 = vrot.slane %v41, %v506
    %v508 = vlaneseq
    %v509 = vshrl.u32 %v508, 7
    %v510 = vsub.s32 0, %v509
    %v511 = vrot.slane %v42, %v510
    %v512 = vlaneseq
    %v513 = vshrl.u32 %v512, 7
    %v514 = vsub.s32 0, %v513
    %v515 = vrot.slane %v43, %v514
    %v516 = vmul.f32 %v503, %v232
    %v517 = vmul.f32 %v507, %v233
    %v518 = vmul.f32 %v511, %v234
    %v519 = vmul.f32 %v515, %v235
    %v520 = vlaneseq
    %v521 = vshrl.u32 %v520, 7
    %v522 = vsub.s32 1, %v521
    %v523 = vrot.slane %v40, %v522
    %v524 = vlaneseq
    %v525 = vshrl.u32 %v524, 7
    %v526 = vsub.s32 1, %v525
    %v527 = vrot.slane %v41, %v526
    %v528 = vlaneseq
    %v529 = vshrl.u32 %v528, 7
    %v530 = vsub.s32 1, %v529
    %v531 = vrot.slane %v42, %v530
    %v532 = vlaneseq
    %v533 = vshrl.u32 %v532, 7
    %v534 = vsub.s32 1, %v533
    %v535 = vrot.slane %v43, %v534
    %v536 = vmul.f32 %v523, %v232
    %v537 = vmul.f32 %v527, %v233
    %v538 = vmul.f32 %v531, %v234
    %v539 = vmul.f32 %v535, %v235
    %v544 = vrot.slane %v536, 4
    %v545 = vrot.slane %v537, 4
    %v546 = vrot.slane %v538, 4
    %v547 = vrot.slane %v539, 4
    %v552 = vadd.f32 %v516, %v544
    %v553 = vadd.f32 %v517, %v545
    %v554 = vadd.f32 %v518, %v546
    %v555 = vadd.f32 %v519, %v547
    %v556 = vlaneseq
    %v557 = vshrl.u32 %v556, 7
    %v558 = vsub.s32 2, %v557
    %v559 = vrot.slane %v40, %v558
    %v560 = vlaneseq
    %v561 = vshrl.u32 %v560, 7
    %v562 = vsub.s32 2, %v561
    %v563 = vrot.slane %v41, %v562
    %v564 = vlaneseq
    %v565 = vshrl.u32 %v564, 7
    %v566 = vsub.s32 2, %v565
    %v567 = vrot.slane %v42, %v566
    %v568 = vlaneseq
    %v569 = vshrl.u32 %v568, 7
    %v570 = vsub.s32 2, %v569
    %v571 = vrot.slane %v43, %v570
    %v572 = vmul.f32 %v559, %v236
    %v573 = vmul.f32 %v563, %v237
    %v574 = vmul.f32 %v567, %v238
    %v575 = vmul.f32 %v571, %v239
    %v576 = vadd.f32 %v552, %v572
    %v577 = vadd.f32 %v553, %v573
    %v578 = vadd.f32 %v554, %v574
    %v579 = vadd.f32 %v555, %v575
    %v580 = vlaneseq
    %v581 = vshrl.u32 %v580, 7
    %v582 = vsub.s32 3, %v581
    %v583 = vrot.slane %v40, %v582
    %v584 = vlaneseq
    %v585 = vshrl.u32 %v584, 7
    %v586 = vsub.s32 3, %v585
    %v587 = vrot.slane %v41, %v586
    %v588 = vlaneseq
    %v589 = vshrl.u32 %v588, 7
    %v590 = vsub.s32 3, %v589
    %v591 = vrot.slane %v42, %v590
    %v592 = vlaneseq
    %v593 = vshrl.u32 %v592, 7
    %v594 = vsub.s32 3, %v593
    %v595 = vrot.slane %v43, %v594
    %v596 = vmul.f32 %v583, %v236
    %v597 = vmul.f32 %v587, %v237
    %v598 = vmul.f32 %v591, %v238
    %v599 = vmul.f32 %v595, %v239
    %v604 = vrot.slane %v596, 4
    %v605 = vrot.slane %v597, 4
    %v606 = vrot.slane %v598, 4
    %v607 = vrot.slane %v599, 4
    %v612 = vadd.f32 %v576, %v604
    %v613 = vadd.f32 %v577, %v605
    %v614 = vadd.f32 %v578, %v606
    %v615 = vadd.f32 %v579, %v607
    %616 = vst [vmem:[#allocation5 + $0x20] sm:$0xf] %v612
    %617 = vst [vmem:[#allocation5 + $0x28] sm:$0xf] %v613
    %618 = vst [vmem:[#allocation5 + $0x30] sm:$0xf] %v614
    %619 = vst [vmem:[#allocation5 + $0x38] sm:$0xf] %v615
    %v620 = vlaneseq
    %v621 = vshrl.u32 %v620, 7
    %v622 = vsub.s32 4, %v621
    %v623 = vrot.slane %v40, %v622
    %v624 = vlaneseq
    %v625 = vshrl.u32 %v624, 7
    %v626 = vsub.s32 4, %v625
    %v627 = vrot.slane %v41, %v626
    %v628 = vlaneseq
    %v629 = vshrl.u32 %v628, 7
    %v630 = vsub.s32 4, %v629
    %v631 = vrot.slane %v42, %v630
    %v632 = vlaneseq
    %v633 = vshrl.u32 %v632, 7
    %v634 = vsub.s32 4, %v633
    %v635 = vrot.slane %v43, %v634
    %v636 = vmul.f32 %v623, %v232
    %v637 = vmul.f32 %v627, %v233
    %v638 = vmul.f32 %v631, %v234
    %v639 = vmul.f32 %v635, %v235
    %v640 = vlaneseq
    %v641 = vshrl.u32 %v640, 7
    %v642 = vsub.s32 5, %v641
    %v643 = vrot.slane %v40, %v642
    %v644 = vlaneseq
    %v645 = vshrl.u32 %v644, 7
    %v646 = vsub.s32 5, %v645
    %v647 = vrot.slane %v41, %v646
    %v648 = vlaneseq
    %v649 = vshrl.u32 %v648, 7
    %v650 = vsub.s32 5, %v649
    %v651 = vrot.slane %v42, %v650
    %v652 = vlaneseq
    %v653 = vshrl.u32 %v652, 7
    %v654 = vsub.s32 5, %v653
    %v655 = vrot.slane %v43, %v654
    %v656 = vmul.f32 %v643, %v232
    %v657 = vmul.f32 %v647, %v233
    %v658 = vmul.f32 %v651, %v234
    %v659 = vmul.f32 %v655, %v235
    %v664 = vrot.slane %v656, 4
    %v665 = vrot.slane %v657, 4
    %v666 = vrot.slane %v658, 4
    %v667 = vrot.slane %v659, 4
    %v672 = vadd.f32 %v636, %v664
    %v673 = vadd.f32 %v637, %v665
    %v674 = vadd.f32 %v638, %v666
    %v675 = vadd.f32 %v639, %v667
    %v676 = vlaneseq
    %v677 = vshrl.u32 %v676, 7
    %v678 = vsub.s32 6, %v677
    %v679 = vrot.slane %v40, %v678
    %v680 = vlaneseq
    %v681 = vshrl.u32 %v680, 7
    %v682 = vsub.s32 6, %v681
    %v683 = vrot.slane %v41, %v682
    %v684 = vlaneseq
    %v685 = vshrl.u32 %v684, 7
    %v686 = vsub.s32 6, %v685
    %v687 = vrot.slane %v42, %v686
    %v688 = vlaneseq
    %v689 = vshrl.u32 %v688, 7
    %v690 = vsub.s32 6, %v689
    %v691 = vrot.slane %v43, %v690
    %v692 = vmul.f32 %v679, %v236
    %v693 = vmul.f32 %v683, %v237
    %v694 = vmul.f32 %v687, %v238
    %v695 = vmul.f32 %v691, %v239
    %v696 = vadd.f32 %v672, %v692
    %v697 = vadd.f32 %v673, %v693
    %v698 = vadd.f32 %v674, %v694
    %v699 = vadd.f32 %v675, %v695
    %v700 = vlaneseq
    %v701 = vshrl.u32 %v700, 7
    %v702 = vsub.s32 7, %v701
    %v703 = vrot.slane %v40, %v702
    %v704 = vlaneseq
    %v705 = vshrl.u32 %v704, 7
    %v706 = vsub.s32 7, %v705
    %v707 = vrot.slane %v41, %v706
    %v708 = vlaneseq
    %v709 = vshrl.u32 %v708, 7
    %v710 = vsub.s32 7, %v709
    %v711 = vrot.slane %v42, %v710
    %v712 = vlaneseq
    %v713 = vshrl.u32 %v712, 7
    %v714 = vsub.s32 7, %v713
    %v715 = vrot.slane %v43, %v714
    %v716 = vmul.f32 %v703, %v236
    %v717 = vmul.f32 %v707, %v237
    %v718 = vmul.f32 %v711, %v238
    %v719 = vmul.f32 %v715, %v239
    %v724 = vrot.slane %v716, 4
    %v725 = vrot.slane %v717, 4
    %v726 = vrot.slane %v718, 4
    %v727 = vrot.slane %v719, 4
    %v732 = vadd.f32 %v696, %v724
    %v733 = vadd.f32 %v697, %v725
    %v734 = vadd.f32 %v698, %v726
    %v735 = vadd.f32 %v699, %v727
    %v740 = vrot.slane %v732, 4
    %v741 = vrot.slane %v733, 4
    %v742 = vrot.slane %v734, 4
    %v743 = vrot.slane %v735, 4
    %748 = vst [vmem:[#allocation5 + $0x20] sm:$0xf0] %v740
    %749 = vst [vmem:[#allocation5 + $0x28] sm:$0xf0] %v741
    %750 = vst [vmem:[#allocation5 + $0x30] sm:$0xf0] %v742
    %751 = vst [vmem:[#allocation5 + $0x38] sm:$0xf0] %v743
    %v752 = vlaneseq
    %v753 = vshrl.u32 %v752, 7
    %v754 = vsub.s32 0, %v753
    %v755 = vrot.slane %v44, %v754
    %v756 = vlaneseq
    %v757 = vshrl.u32 %v756, 7
    %v758 = vsub.s32 0, %v757
    %v759 = vrot.slane %v45, %v758
    %v760 = vlaneseq
    %v761 = vshrl.u32 %v760, 7
    %v762 = vsub.s32 0, %v761
    %v763 = vrot.slane %v46, %v762
    %v764 = vlaneseq
    %v765 = vshrl.u32 %v764, 7
    %v766 = vsub.s32 0, %v765
    %v767 = vrot.slane %v47, %v766
    %v768 = vmul.f32 %v755, %v232
    %v769 = vmul.f32 %v759, %v233
    %v770 = vmul.f32 %v763, %v234
    %v771 = vmul.f32 %v767, %v235
    %v772 = vlaneseq
    %v773 = vshrl.u32 %v772, 7
    %v774 = vsub.s32 1, %v773
    %v775 = vrot.slane %v44, %v774
    %v776 = vlaneseq
    %v777 = vshrl.u32 %v776, 7
    %v778 = vsub.s32 1, %v777
    %v779 = vrot.slane %v45, %v778
    %v780 = vlaneseq
    %v781 = vshrl.u32 %v780, 7
    %v782 = vsub.s32 1, %v781
    %v783 = vrot.slane %v46, %v782
    %v784 = vlaneseq
    %v785 = vshrl.u32 %v784, 7
    %v786 = vsub.s32 1, %v785
    %v787 = vrot.slane %v47, %v786
    %v788 = vmul.f32 %v775, %v232
    %v789 = vmul.f32 %v779, %v233
    %v790 = vmul.f32 %v783, %v234
    %v791 = vmul.f32 %v787, %v235
    %v796 = vrot.slane %v788, 4
    %v797 = vrot.slane %v789, 4
    %v798 = vrot.slane %v790, 4
    %v799 = vrot.slane %v791, 4
    %v804 = vadd.f32 %v768, %v796
    %v805 = vadd.f32 %v769, %v797
    %v806 = vadd.f32 %v770, %v798
    %v807 = vadd.f32 %v771, %v799
    %v808 = vlaneseq
    %v809 = vshrl.u32 %v808, 7
    %v810 = vsub.s32 2, %v809
    %v811 = vrot.slane %v44, %v810
    %v812 = vlaneseq
    %v813 = vshrl.u32 %v812, 7
    %v814 = vsub.s32 2, %v813
    %v815 = vrot.slane %v45, %v814
    %v816 = vlaneseq
    %v817 = vshrl.u32 %v816, 7
    %v818 = vsub.s32 2, %v817
    %v819 = vrot.slane %v46, %v818
    %v820 = vlaneseq
    %v821 = vshrl.u32 %v820, 7
    %v822 = vsub.s32 2, %v821
    %v823 = vrot.slane %v47, %v822
    %v824 = vmul.f32 %v811, %v236
    %v825 = vmul.f32 %v815, %v237
    %v826 = vmul.f32 %v819, %v238
    %v827 = vmul.f32 %v823, %v239
    %v828 = vadd.f32 %v804, %v824
    %v829 = vadd.f32 %v805, %v825
    %v830 = vadd.f32 %v806, %v826
    %v831 = vadd.f32 %v807, %v827
    %v832 = vlaneseq
    %v833 = vshrl.u32 %v832, 7
    %v834 = vsub.s32 3, %v833
    %v835 = vrot.slane %v44, %v834
    %v836 = vlaneseq
    %v837 = vshrl.u32 %v836, 7
    %v838 = vsub.s32 3, %v837
    %v839 = vrot.slane %v45, %v838
    %v840 = vlaneseq
    %v841 = vshrl.u32 %v840, 7
    %v842 = vsub.s32 3, %v841
    %v843 = vrot.slane %v46, %v842
    %v844 = vlaneseq
    %v845 = vshrl.u32 %v844, 7
    %v846 = vsub.s32 3, %v845
    %v847 = vrot.slane %v47, %v846
    %v848 = vmul.f32 %v835, %v236
    %v849 = vmul.f32 %v839, %v237
    %v850 = vmul.f32 %v843, %v238
    %v851 = vmul.f32 %v847, %v239
    %v856 = vrot.slane %v848, 4
    %v857 = vrot.slane %v849, 4
    %v858 = vrot.slane %v850, 4
    %v859 = vrot.slane %v851, 4
    %v864 = vadd.f32 %v828, %v856
    %v865 = vadd.f32 %v829, %v857
    %v866 = vadd.f32 %v830, %v858
    %v867 = vadd.f32 %v831, %v859
    %868 = vst [vmem:[#allocation5 + $0x40] sm:$0xf] %v864
    %869 = vst [vmem:[#allocation5 + $0x48] sm:$0xf] %v865
    %870 = vst [vmem:[#allocation5 + $0x50] sm:$0xf] %v866
    %871 = vst [vmem:[#allocation5 + $0x58] sm:$0xf] %v867
    // Predicated region
    $region18: #{tpu_custom_call.1} parent=1 // pred_check
      _
    $region19: #{tpu_custom_call.1} parent=1 // pred_check_branch
      %873 = sbr.rel (0) target = $region21
    $region20: #{tpu_custom_call.1} parent=1 // pred_region
      %s875 = ssub.s32 1536, 1536
      %876 = vsyncadd [#allocation4], %s875
      %s877 = sshll.u32 [#allocation5], 4
      %s878 = int_to_ptr.vmem [resolvable:$true] %s877
      %883 = dma.vmem_to_hbm [thread:$0]  %s878, 1536, %s3, [#allocation4], 512, 512, 32
    $region21: #{tpu_custom_call.1} parent=1 // pred_fallthru
      _
    // Predicated region
    $region22: #{tpu_custom_call.1} parent=1 // pred_check
      _
    $region23: #{tpu_custom_call.1} parent=1 // pred_check_branch
      %885 = sbr.rel (0) target = $region25
    $region24: #{tpu_custom_call.1} parent=1 // pred_region
      %s887 = ssub.s32 1024, 1024
      %888 = vsyncadd [#allocation7], %s887
      %s889 = sshll.u32 [#allocation6], 4
      %s890 = int_to_ptr.vmem [resolvable:$true] %s889
      %895 = dma.vmem_to_hbm [thread:$0]  %s890, 1024, %s4, [#allocation7], 512, 512, 32
    $region25: #{tpu_custom_call.1} parent=1 // pred_fallthru
      _
    // Predicated region
    $region26: #{tpu_custom_call.1} parent=1 // pred_check
      _
    $region27: #{tpu_custom_call.1} parent=1 // pred_check_branch
      %897 = sbr.rel (0) target = $region29
    $region28: #{tpu_custom_call.1} parent=1 // pred_region
      %898 = dma.done [#allocation4], 1536
    $region29: #{tpu_custom_call.1} parent=1 // pred_fallthru
      _
    // Predicated region
    $region30: #{tpu_custom_call.1} parent=1 // pred_check
      _
    $region31: #{tpu_custom_call.1} parent=1 // pred_check_branch
      %900 = sbr.rel (0) target = $region33
    $region32: #{tpu_custom_call.1} parent=1 // pred_region
      %901 = dma.done [#allocation7], 1024
    $region33: #{tpu_custom_call.1} parent=1 // pred_fallthru
      _
    %902 = vsyncpa [#allocation3], 1
    %903 = vsyncpa [#allocation4], 1
    %904 = vsyncpa [#allocation7], 1

</llo_original>
